<compile_context>
chip_gen: v5e
topology: v5e:2x2
jax: 0.10.0
libtpu: 0.0.40
codegen_flags: <defaults>
</compile_context>

<pallas_src>
import functools

import jax
import jax.numpy as jnp
from jax.experimental import pallas as pl
from jax.experimental.pallas import tpu as pltpu

# Column layout of the packed parameter slab (shape (features, 8), f32).
#   _A2P  = |w2| * exp(b1r)        (amplitude with first-layer real bias folded in)
#   _B1IP = b1i + atan2(w2i, w2r)  (imag bias with second-layer phase folded in)
# b2i never reaches the real part of the output, so it is dropped.
_W1R, _W1I, _B1IP, _A2P, _B2R = 0, 1, 2, 3, 4
_NCOLS = 8  # padded so the slab is a tidy (F, 8) block


def single_approx_kernel(p_ref, x_ref, o_ref, *, compute_dtype):
    # p_ref: (F, 8)  parameter slab (constant index_map -> resident across steps).
    # x_ref: (1, TB) input batch tile, batch on lanes.
    # o_ref: (1, TB) output tile (lane-dense store).
    x = x_ref[...]                              # (1, TB)
    w1r = p_ref[:, _W1R:_W1R + 1]               # (F, 1)
    w1i = p_ref[:, _W1I:_W1I + 1]               # (F, 1)
    b1ip = p_ref[:, _B1IP:_B1IP + 1]            # (F, 1)
    a2p = p_ref[:, _A2P:_A2P + 1]               # (F, 1)
    b2r = p_ref[0:1, _B2R:_B2R + 1]             # (1, 1)

    # First complex linear (in_var == 1): outer product via VPU broadcast FMA.
    # b1r is folded into a2p, so the real part needs no bias add.
    yr = (w1r * x).astype(compute_dtype)        # (F, TB)  Re(W1 x)
    yi = (w1i * x + b1ip).astype(compute_dtype)  # (F, TB) Im(W1 x + b1) + arg(w2)

    # Re[(exp(y) W2) + b2]
    #   = sum_f |w2_f| exp(b1r_f) * exp(Re(w1_f) x) * cos(Im(w1_f) x + b1i_f + arg(w2_f)) + Re b2
    # Transcendentals run in compute_dtype; the F-reduction accumulates in f32.
    trans = (jnp.exp(yr) * jnp.cos(yi)).astype(jnp.float32)   # (F, TB)
    contrib = a2p * trans                                     # (F, TB) f32

    # Second complex linear, real part only (final_var == 1): XLU sublane reduce.
    o_ref[...] = jnp.sum(contrib, axis=0, keepdims=True) + b2r


def pack_params(w1r, w1i, b1r, b1i, w2r, w2i, b2r):
    """Pack all SingleApprox params into one (features, 8) f32 slab.

    Expected layouts (already transposed for x @ W):
      w1r/w1i: (in_var=1, features), b1r/b1i: (1, features),
      w2r/w2i: (features, final_var=1), b2r: (1, final_var=1).
    """
    F = w1r.shape[1]
    w1r_c = w1r.reshape(F).astype(jnp.float32)
    w1i_c = w1i.reshape(F).astype(jnp.float32)
    b1r_c = b1r.reshape(F).astype(jnp.float32)
    b1i_c = b1i.reshape(F).astype(jnp.float32)
    w2r_c = w2r.reshape(F).astype(jnp.float32)
    w2i_c = w2i.reshape(F).astype(jnp.float32)
    # Fold W2 into amplitude/phase and fold exp(b1r) into the amplitude:
    #   exp(yr)*(cos(yi)*w2r - sin(yi)*w2i)
    #     = |w2| * exp(b1r) * exp(w1r*x) * cos(yi + atan2(w2i, w2r))
    amp = jnp.sqrt(w2r_c * w2r_c + w2i_c * w2i_c)
    phi = jnp.arctan2(w2i_c, w2r_c)
    a2p = amp * jnp.exp(b1r_c)
    b1ip = b1i_c + phi
    b2r_col = jnp.zeros((F,), jnp.float32).at[0].set(
        b2r.reshape(()).astype(jnp.float32))
    zeros = jnp.zeros((F,), jnp.float32)
    cols = [w1r_c, w1i_c, b1ip, a2p, b2r_col, zeros, zeros, zeros]
    return jnp.stack(cols, axis=1)  # (F, 8)


def single_approx(x, params, *, block_b=8192, transcendental_dtype=jnp.float32):
    """x: (B, in_var=1) float32.  params: (features, 8) slab from pack_params.

    block_b: max lane-tile size (multiple of 128); sweep 4096-16384 per chip.
    transcendental_dtype: jnp.float32 (default) or jnp.bfloat16 (v6e/v7x only;
      ~2x on the binding VALU/EUP slot but looser accuracy).
    """
    B, in_var = x.shape
    assert in_var == 1, "kernel specialized for module default in_var=1"
    F, ncols = params.shape
    assert ncols == _NCOLS
    assert block_b % 128 == 0 and block_b >= 256

    x_row = x.reshape(1, B)  # batch on lanes (contiguous reshape, no transpose)

    if B < 256:
        tb = B  # tiny batch: single full-extent tile
    elif B <= block_b:
        # Split into >= 2 lane-aligned tiles so the "parallel" axis can feed
        # both v7x TensorCores (grid=(1,) would idle one core).
        tb = pl.cdiv(pl.cdiv(B, 2), 128) * 128
    else:
        tb = block_b
    grid = (pl.cdiv(B, tb),)

    # VMEM budget: ~4 live f32 + ~4 compute-dtype (F, tb) temporaries, plus
    # double-buffered (1, tb) I/O blocks and the resident param slab, plus
    # headroom.  Clamp to 48 MiB (v7x has only 64 MiB physical per TC).
    cdt = jnp.dtype(transcendental_dtype)
    temp_bytes = F * tb * (4 * 4 + 4 * cdt.itemsize)
    io_bytes = 2 * (2 * tb * 4)
    param_bytes = 2 * F * _NCOLS * 4
    vmem_limit = min(max(temp_bytes + io_bytes + param_bytes + (8 << 20),
                         16 << 20), 48 << 20)

    kernel = functools.partial(single_approx_kernel, compute_dtype=cdt)
    out_row = pl.pallas_call(
        kernel,
        out_shape=jax.ShapeDtypeStruct((1, B), jnp.float32),
        grid=grid,
        in_specs=[
            pl.BlockSpec((F, _NCOLS), lambda i: (0, 0)),  # params stay resident
            pl.BlockSpec((1, tb), lambda i: (0, i)),
        ],
        out_specs=pl.BlockSpec((1, tb), lambda i: (0, i)),
        compiler_params=pltpu.CompilerParams(
            dimension_semantics=("parallel",),
            vmem_limit_bytes=int(vmem_limit)),
    )(params, x_row)
    return out_row.reshape(B, 1)


def reference(x, w1r, w1i, b1r, b1i, w2r, w2i, b2r, b2i):
    # Pure-JAX complex64 reference mirroring the PyTorch forward.
    xc = x.astype(jnp.complex64)
    w1 = (w1r + 1j * w1i).astype(jnp.complex64)
    b1 = (b1r + 1j * b1i).astype(jnp.complex64)
    w2 = (w2r + 1j * w2i).astype(jnp.complex64)
    b2 = (b2r + 1j * b2i).astype(jnp.complex64)
    y = xc @ w1 + b1
    e = jnp.exp(y)
    z = e @ w2 + b2
    return jnp.real(z)


if __name__ == "__main__":
    # Module defaults: in_var=1, features=40, final_var=1.
    B, in_var, features, final_var = 8, 1, 40, 1

    key = jax.random.PRNGKey(0)
    ks = jax.random.split(key, 12)
    scale1 = 1.0 / (in_var ** 0.5)
    scale2 = 1.0 / (features ** 0.5)

    x = jax.random.normal(ks[0], (B, in_var), dtype=jnp.float32)

    # Deterministic synthetic parameters (layout: already transposed for x @ W).
    w1r = jax.random.uniform(ks[1], (in_var, features), jnp.float32, -scale1, scale1)
    w1i = jax.random.uniform(ks[2], (in_var, features), jnp.float32, -scale1, scale1)
    b1r = jax.random.uniform(ks[3], (1, features), jnp.float32, -scale1, scale1)
    b1i = jax.random.uniform(ks[4], (1, features), jnp.float32, -scale1, scale1)
    w2r = jax.random.uniform(ks[5], (features, final_var), jnp.float32, -scale2, scale2)
    w2i = jax.random.uniform(ks[6], (features, final_var), jnp.float32, -scale2, scale2)
    b2r = jax.random.uniform(ks[7], (1, final_var), jnp.float32, -scale2, scale2)
    b2i = jax.random.uniform(ks[8], (1, final_var), jnp.float32, -scale2, scale2)
    # b2i never reaches the real part of the output, so the kernel drops it.

    params = pack_params(w1r, w1i, b1r, b1i, w2r, w2i, b2r)

    # 1) Tiny batch (single full-extent tile).
    out = jax.block_until_ready(single_approx(x, params))
    ref = reference(x, w1r, w1i, b1r, b1i, w2r, w2i, b2r, b2i)
    assert out.shape == (B, final_var)
    assert jnp.allclose(out, ref, atol=1e-4, rtol=1e-4)

    # 2) Moderate batch: even 2-way lane-aligned split (grid=(2,), v7x megacore).
    B2 = 4096
    x2 = jax.random.normal(ks[9], (B2, in_var), dtype=jnp.float32)
    out2 = jax.block_until_ready(single_approx(x2, params))
    ref2 = reference(x2, w1r, w1i, b1r, b1i, w2r, w2i, b2r, b2i)
    assert out2.shape == (B2, final_var)
    assert jnp.allclose(out2, ref2, atol=1e-4, rtol=1e-4)

    # 3) Large ragged batch: multi-step serial grid with big lane-dense tiles.
    B3 = 20000
    x3 = jax.random.normal(ks[10], (B3, in_var), dtype=jnp.float32)
    out3 = jax.block_until_ready(single_approx(x3, params, block_b=8192))
    ref3 = reference(x3, w1r, w1i, b1r, b1i, w2r, w2i, b2r, b2i)
    assert out3.shape == (B3, final_var)
    assert jnp.allclose(out3, ref3, atol=1e-4, rtol=1e-4)

    # 4) Optional bf16 transcendental path (intended for v6e/v7x); f32 accumulate.
    #    Loose tolerance: bf16 is not expected to hold 1e-4.
    out_bf16 = jax.block_until_ready(
        single_approx(x2, params, transcendental_dtype=jnp.bfloat16))
    assert out_bf16.shape == (B2, final_var)
    assert bool(jnp.all(jnp.isfinite(out_bf16)))
    assert jnp.allclose(out_bf16, ref2, atol=0.5, rtol=0.05)

    print("KERNEL_OK")
</pallas_src>

<mosaic_0001>
module attributes {stable_mosaic.version = 11 : i64} {
  func.func @single_approx_kernel(%arg0: i32, %arg1: memref<40x8xf32, #tpu.memory_space<vmem>>, %arg2: memref<1x8xf32, #tpu.memory_space<vmem>>, %arg3: memref<1x8xf32, #tpu.memory_space<vmem>>) attributes {dimension_semantics = [#tpu.dimension_semantics<parallel>], iteration_bounds = array<i64: 1>, scalar_prefetch = 0 : i64, scratch_operands = 0 : i64, tpu.core_type = #tpu.core_type<tc>, window_params = [{pipeline_mode = #tpu.pipeline_mode<synchronous>, transform_indices = @transform_0, window_bounds = array<i64: 40, 8>}, {transform_indices = @transform_1, window_bounds = array<i64: 1, 8>}, {transform_indices = @transform_2, window_bounds = array<i64: 1, 8>}]} {
    %c0 = arith.constant 0 : index
    %c0_0 = arith.constant 0 : index
    %0 = vector.load %arg2[%c0, %c0_0] : memref<1x8xf32, #tpu.memory_space<vmem>>, vector<1x8xf32>
    %c0_1 = arith.constant 0 : index
    %c0_2 = arith.constant 0 : index
    %1 = vector.load %arg1[%c0_1, %c0_2] : memref<40x8xf32, #tpu.memory_space<vmem>>, vector<40x1xf32>
    %c0_3 = arith.constant 0 : index
    %c1 = arith.constant 1 : index
    %2 = vector.load %arg1[%c0_3, %c1] : memref<40x8xf32, #tpu.memory_space<vmem>>, vector<40x1xf32>
    %c0_4 = arith.constant 0 : index
    %c2 = arith.constant 2 : index
    %3 = vector.load %arg1[%c0_4, %c2] : memref<40x8xf32, #tpu.memory_space<vmem>>, vector<40x1xf32>
    %c0_5 = arith.constant 0 : index
    %c3 = arith.constant 3 : index
    %4 = vector.load %arg1[%c0_5, %c3] : memref<40x8xf32, #tpu.memory_space<vmem>>, vector<40x1xf32>
    %c0_6 = arith.constant 0 : index
    %c4 = arith.constant 4 : index
    %5 = vector.load %arg1[%c0_6, %c4] : memref<40x8xf32, #tpu.memory_space<vmem>>, vector<1x1xf32>
    %6 = vector.broadcast %1 : vector<40x1xf32> to vector<40x8xf32>
    %7 = vector.broadcast %0 : vector<1x8xf32> to vector<40x8xf32>
    %8 = arith.mulf %6, %7 : vector<40x8xf32>
    %9 = vector.broadcast %2 : vector<40x1xf32> to vector<40x8xf32>
    %10 = vector.broadcast %0 : vector<1x8xf32> to vector<40x8xf32>
    %11 = arith.mulf %9, %10 : vector<40x8xf32>
    %12 = vector.broadcast %3 : vector<40x1xf32> to vector<40x8xf32>
    %13 = arith.addf %11, %12 : vector<40x8xf32>
    %14 = math.exp %8 : vector<40x8xf32>
    %15 = math.cos %13 : vector<40x8xf32>
    %16 = arith.mulf %14, %15 : vector<40x8xf32>
    %17 = vector.broadcast %4 : vector<40x1xf32> to vector<40x8xf32>
    %18 = arith.mulf %17, %16 : vector<40x8xf32>
    %cst = arith.constant dense<0.000000e+00> : vector<8xf32>
    %19 = vector.multi_reduction <add>, %18, %cst [0] : vector<40x8xf32> to vector<8xf32>
    %20 = vector.shape_cast %19 : vector<8xf32> to vector<1x8xf32>
    %21 = vector.broadcast %5 : vector<1x1xf32> to vector<1x8xf32>
    %22 = arith.addf %20, %21 : vector<1x8xf32>
    %c0_7 = arith.constant 0 : index
    %c0_8 = arith.constant 0 : index
    %23 = vector.load %arg3[%c0_7, %c0_8] : memref<1x8xf32, #tpu.memory_space<vmem>>, vector<1x8xf32>
    tpu.vector_store %arg3[%c0_7, %c0_8], %22 {strides = array<i32>} : memref<1x8xf32, #tpu.memory_space<vmem>>, vector<1x8xf32>,
    return
  }
  func.func @transform_0(%arg0: i32) -> (i32, i32) {
    %c0_i32 = arith.constant 0 : i32
    %c0_i32_0 = arith.constant 0 : i32
    %c0_i32_1 = arith.constant 0 : i32
    return %c0_i32, %c0_i32_0 : i32, i32
  }
  func.func @transform_1(%arg0: i32) -> (i32, i32) {
    %c0_i32 = arith.constant 0 : i32
    %c0_i32_0 = arith.constant 0 : i32
    return %c0_i32, %arg0 : i32, i32
  }
  func.func @transform_2(%arg0: i32) -> (i32, i32) {
    %c0_i32 = arith.constant 0 : i32
    %c0_i32_0 = arith.constant 0 : i32
    return %c0_i32, %arg0 : i32, i32
  }
}

</mosaic_0001>

<llo_original>
// kernel: tpu_custom_call.1
$region0: #{tpu_custom_call.1}
  #allocation0 [shape = 'u32[]', space=smem, size = 0x4, offset = 0x4, fixed_abs, tag = 'smem constant byte address 0x4 - core index']
  #allocation1 [shape = 'u32[72,128]{1,0:T(1,128)}', space=vmem, size = 0x9000, scoped, tag = 'internal scratch']
  %s0 = inlined_call_operand.vmem [shape: f32[40,8], index: 0, kind: input, shape index: {}]
  %s1 = inlined_call_operand.vmem [shape: f32[1,8], index: 1, kind: input, shape index: {}]
  %s2 = inlined_call_operand.hbm [shape: f32[1,8], index: 2, kind: output, shape index: {}]
  %s3 = sld [smem:[#allocation0]]
  $region18: #{tpu_custom_call.1} parent=0
    _
  %s5 = ssub.s32 1, %s3
  %s6 = scalar_select 0, %s5, %s3
  $region1: #{tpu_custom_call.1} parent=0
    #allocation2 [shape = 'u8[512]{0}', space=vmem, size = 0x400, scoped, tag = 'output window, operand 0, single buffered']
    #allocation3 [shape = 's32[1]{0}', space=sflag, size = 0x4, scoped, tag = 'scoped memory for tpu_custom_call.1']
    %7 = vsyncpa [#allocation3], 0
    // Predicated region
    $region2: #{tpu_custom_call.1} parent=1 // pred_check
      _
    $region3: #{tpu_custom_call.1} parent=1 // pred_check_branch
      %9 = sbr.rel (0) target = $region5
    $region4: #{tpu_custom_call.1} parent=1 // pred_region
      _
    $region5: #{tpu_custom_call.1} parent=1 // pred_fallthru
      _
    // Predicated region
    $region6: #{tpu_custom_call.1} parent=1 // pred_check
      _
    $region7: #{tpu_custom_call.1} parent=1 // pred_check_branch
      %11 = sbr.rel (0) target = $region9
    $region8: #{tpu_custom_call.1} parent=1 // pred_region
      _
    $region9: #{tpu_custom_call.1} parent=1 // pred_fallthru
      _
    %v12 = vld [vmem:[%s1] sm:$0x1]
    %v13 = vld [vmem:[%s0] sm:$0xff]
    %v14 = vld [vmem:[%s0 + $0x8] sm:$0xff]
    %v15 = vld [vmem:[%s0 + $0x10] sm:$0xff]
    %v16 = vld [vmem:[%s0 + $0x18] sm:$0xff]
    %v17 = vld [vmem:[%s0 + $0x20] sm:$0xff]
    %v18 = vld [vmem:[%s0] sm:$0x1]
    %20 = vset.pattern.permute.xlu0 0
    %21 = vperm.xlu0 %20, %v13
    %v22 = vpop.permute.xlu0 %21
    %25 = vset.pattern.permute.xlu0 0
    %26 = vperm.xlu0 %25, %v14
    %v27 = vpop.permute.xlu0 %26
    %30 = vset.pattern.permute.xlu0 0
    %31 = vperm.xlu0 %30, %v15
    %v32 = vpop.permute.xlu0 %31
    %35 = vset.pattern.permute.xlu0 0
    %36 = vperm.xlu0 %35, %v16
    %v37 = vpop.permute.xlu0 %36
    %40 = vset.pattern.permute.xlu0 0
    %41 = vperm.xlu0 %40, %v17
    %v42 = vpop.permute.xlu0 %41
    %v45 = vperm.slane %v12, 0
    %v47 = vmul.f32 %v22, %v45
    %v48 = vmul.f32 %v27, %v45
    %v49 = vmul.f32 %v32, %v45
    %v50 = vmul.f32 %v37, %v45
    %v51 = vmul.f32 %v42, %v45
    %52 = vset.pattern.permute.xlu0 1
    %53 = vperm.xlu0 %52, %v13
    %v54 = vpop.permute.xlu0 %53
    %56 = vset.pattern.permute.xlu0 1
    %57 = vperm.xlu0 %56, %v14
    %v58 = vpop.permute.xlu0 %57
    %60 = vset.pattern.permute.xlu0 1
    %61 = vperm.xlu0 %60, %v15
    %v62 = vpop.permute.xlu0 %61
    %64 = vset.pattern.permute.xlu0 1
    %65 = vperm.xlu0 %64, %v16
    %v66 = vpop.permute.xlu0 %65
    %68 = vset.pattern.permute.xlu0 1
    %69 = vperm.xlu0 %68, %v17
    %v70 = vpop.permute.xlu0 %69
    %v72 = vmul.f32 %v54, %v45
    %v73 = vmul.f32 %v58, %v45
    %v74 = vmul.f32 %v62, %v45
    %v75 = vmul.f32 %v66, %v45
    %v76 = vmul.f32 %v70, %v45
    %77 = vset.pattern.permute.xlu0 2
    %78 = vperm.xlu0 %77, %v13
    %v79 = vpop.permute.xlu0 %78
    %81 = vset.pattern.permute.xlu0 2
    %82 = vperm.xlu0 %81, %v14
    %v83 = vpop.permute.xlu0 %82
    %85 = vset.pattern.permute.xlu0 2
    %86 = vperm.xlu0 %85, %v15
    %v87 = vpop.permute.xlu0 %86
    %89 = vset.pattern.permute.xlu0 2
    %90 = vperm.xlu0 %89, %v16
    %v91 = vpop.permute.xlu0 %90
    %93 = vset.pattern.permute.xlu0 2
    %94 = vperm.xlu0 %93, %v17
    %v95 = vpop.permute.xlu0 %94
    %v97 = vadd.f32 %v72, %v79
    %v98 = vadd.f32 %v73, %v83
    %v99 = vadd.f32 %v74, %v87
    %v100 = vadd.f32 %v75, %v91
    %v101 = vadd.f32 %v76, %v95
    %v102 = vmul.f32 %v47, 1.442695
    %v103 = vpow.pop %v102
    %v104 = vmul.f32 %v48, 1.442695
    %v105 = vpow.pop %v104
    %v106 = vmul.f32 %v49, 1.442695
    %v107 = vpow.pop %v106
    %v108 = vmul.f32 %v50, 1.442695
    %v109 = vpow.pop %v108
    %v110 = vmul.f32 %v51, 1.442695
    %v111 = vpow.pop %v110
    %v112 = vand.u32 2147483647, %v97
    %vm113 = vcmp.le.f32.partialorder %v112, 0.7853982
    %vm114 = vcmp.lt.s32.totalorder %v97, 0
    %v115 = vand.u32 %v97, 2139095040
    %v116 = vshrl.u32 %v115, 23
    %v117 = vsub.s32 %v116, 127
    %v118 = vand.u32 2147483647, %v97
    %v119 = vand.u32 %v118, 8388607
    %v120 = vor.u32 %v119, 8388608
    %v121 = vsub.s32 0, %v120
    %v122 = vadd.s32 %v117, 1
    %vm123 = vcmp.gt.s32.totalorder %v122, 0
    %v124 = vsel %vm123, %v122, 0
    %v125 = vshrl.u32 %v124, 5
    %v126 = vand.u32 %v124, 31
    %v127 = vsub.s32 32, %v126
    %v128 = vshrl.u32 683565275, %v127
    %v129 = vshll.u32 683565275, %v126
    %v130 = vshrl.u32 2475754826, %v127
    %v131 = vor.u32 %v129, %v130
    %v132 = vshll.u32 2475754826, %v126
    %v133 = vshrl.u32 2131351028, %v127
    %v134 = vor.u32 %v132, %v133
    %v135 = vshll.u32 2131351028, %v126
    %v136 = vshrl.u32 2102212464, %v127
    %v137 = vor.u32 %v135, %v136
    %v138 = vshll.u32 2102212464, %v126
    %v139 = vshrl.u32 920167782, %v127
    %v140 = vor.u32 %v138, %v139
    %v141 = vshll.u32 920167782, %v126
    %v142 = vshrl.u32 1326507024, %v127
    %v143 = vor.u32 %v141, %v142
    %vm144 = vcmp.lt.s32.totalorder %v125, 1
    %vm145 = vcmp.lt.s32.totalorder %v125, 2
    %vm146 = vcmp.lt.s32.totalorder %v125, 3
    %vm147 = vcmp.lt.s32.totalorder %v125, 4
    %v148 = vsel %vm144, %v128, %v131
    %v149 = vsel %vm147, %v137, 2102212464
    %v150 = vsel %vm146, %v134, %v149
    %v151 = vsel %vm145, %v148, %v150
    %v152 = vsel %vm144, %v131, %v134
    %v153 = vsel %vm147, %v140, 920167782
    %v154 = vsel %vm146, %v137, %v153
    %v155 = vsel %vm145, %v152, %v154
    %v156 = vsel %vm144, %v134, %v137
    %v157 = vsel %vm147, %v143, 1326507024
    %v158 = vsel %vm146, %v140, %v157
    %v159 = vsel %vm145, %v156, %v158
    %v160 = vshll.u32 %v120, 8
    %v161 = vand.u32 %v160, 65535
    %v162 = vshrl.u32 %v160, 16
    %v163 = vand.u32 %v159, 65535
    %v164 = vshrl.u32 %v159, 16
    %v165 = vmul.u32 %v161, %v163
    %v166 = vmul.u32 %v161, %v164
    %v167 = vmul.u32 %v162, %v163
    %v168 = vmul.u32 %v162, %v164
    %v169 = vshll.u32 %v166, 16
    %v170 = vshrl.u32 %v166, 16
    %v171 = vshll.u32 %v167, 16
    %v172 = vshrl.u32 %v167, 16
    %vm173 = vc.u32 %v165, %v169
    %v174 = vsel %vm173, 1, 0
    %v175 = vadd.s32 %v165, %v169
    %v176 = vadd.s32 %v168, %v174
    %vm177 = vc.u32 %v175, %v171
    %v178 = vsel %vm177, 1, 0
    %v179 = vadd.s32 %v175, %v171
    %v180 = vadd.s32 %v176, %v178
    %v181 = vadd.s32 %v180, %v170
    %v182 = vadd.s32 %v181, %v172
    %v183 = vand.u32 %v160, 65535
    %v184 = vshrl.u32 %v160, 16
    %v185 = vand.u32 %v155, 65535
    %v186 = vshrl.u32 %v155, 16
    %v187 = vmul.u32 %v183, %v185
    %v188 = vmul.u32 %v183, %v186
    %v189 = vmul.u32 %v184, %v185
    %v190 = vmul.u32 %v184, %v186
    %v191 = vshll.u32 %v188, 16
    %v192 = vshrl.u32 %v188, 16
    %v193 = vshll.u32 %v189, 16
    %v194 = vshrl.u32 %v189, 16
    %vm195 = vc.u32 %v187, %v191
    %v196 = vsel %vm195, 1, 0
    %v197 = vadd.s32 %v187, %v191
    %v198 = vadd.s32 %v190, %v196
    %vm199 = vc.u32 %v197, %v193
    %v200 = vsel %vm199, 1, 0
    %v201 = vadd.s32 %v197, %v193
    %v202 = vadd.s32 %v198, %v200
    %v203 = vadd.s32 %v202, %v192
    %v204 = vadd.s32 %v203, %v194
    %v205 = vmul.u32 %v160, %v151
    %v206 = vadd.s32 %v182, %v201
    %vm207 = vc.u32 %v182, %v201
    %v208 = vadd.s32 %v204, 1
    %v209 = vsel %vm207, %v208, %v204
    %v210 = vadd.s32 %v205, %v209
    %v211 = vadd.s32 %v210, 536870912
    %v212 = vshrl.u32 %v211, 30
    %v213 = vshll.u32 %v212, 30
    %v214 = vsub.s32 %v210, %v213
    %vm215 = vcmp.lt.s32.totalorder %v214, 0
    %v216 = vsub.s32 0, %v214
    %v217 = vsel %vm215, %v216, %v214
    %v218 = vclz %v217
    %v219 = vsub.s32 %v218, 2
    %vm220 = vcmp.gt.s32.totalorder 0, %v219
    %v221 = vsel %vm220, 0, %v219
    %v222 = vsub.s32 32, %v221
    %v223 = vshll.u32 %v214, %v221
    %v224 = vshrl.u32 %v206, %v222
    %v225 = vor.u32 %v223, %v224
    %v226 = vsub.s32 4294967266, %v221
    %v227 = vadd.s32 %v226, 127
    %v228 = vshll.u32 %v227, 23
    %v229 = vor.u32 4788187, %v228
    %v230 = vand.u32 2147483647, %v229
    %v232 = vcvt.s32.f32 %v225
    %v233 = vmul.f32 %v232, %v230
    %v234 = vxor.u32 %v233, 2147483648
    %v235 = vsel %vm114, %v234, %v233
    %v236 = vsub.s32 4, %v212
    %v237 = vsel %vm114, %v236, %v212
    %v238 = vsel %vm113, %v97, %v235
    %v239 = vsel %vm113, 0, %v237
    %v240 = vmul.f32 %v238, %v238
    %v241 = vmul.f32 %v240, -0.001358992
    %v242 = vadd.f32 %v241, 0.041655596
    %v243 = vmul.f32 %v240, %v242
    %v244 = vadd.f32 %v243, -0.4999988
    %v245 = vmul.f32 %v240, %v244
    %v246 = vadd.f32 1.0, %v245
    %v247 = vmul.f32 %v238, %v238
    %v248 = vmul.f32 %v247, -0.00019511016
    %v249 = vadd.f32 %v248, 0.008332121
    %v250 = vmul.f32 %v247, %v249
    %v251 = vadd.f32 %v250, -0.16666654
    %v252 = vmul.f32 %v247, %v251
    %v253 = vadd.f32 %v252, 1.0
    %v254 = vmul.f32 %v253, %v238
    %vm255 = vweird.f32 %v97
    %v256 = vand.u32 %v239, 3
    %vm257 = vcmp.lt.s32.totalorder %v256, 2
    %vm258 = vcmp.eq.s32.totalorder %v256, 0
    %v259 = vxor.u32 %v254, 2147483648
    %v260 = vsel %vm258, %v246, %v259
    %vm261 = vcmp.eq.s32.totalorder %v256, 2
    %v262 = vxor.u32 %v246, 2147483648
    %v263 = vsel %vm261, %v262, %v254
    %v264 = vsel %vm257, %v260, %v263
    %v265 = vsel %vm255, nan, %v264
    %v266 = vand.u32 2147483647, %v98
    %vm267 = vcmp.le.f32.partialorder %v266, 0.7853982
    %vm268 = vcmp.lt.s32.totalorder %v98, 0
    %v269 = vand.u32 %v98, 2139095040
    %v270 = vshrl.u32 %v269, 23
    %v271 = vsub.s32 %v270, 127
    %v272 = vand.u32 2147483647, %v98
    %v273 = vand.u32 %v272, 8388607
    %v274 = vor.u32 %v273, 8388608
    %v275 = vsub.s32 0, %v274
    %v276 = vadd.s32 %v271, 1
    %vm277 = vcmp.gt.s32.totalorder %v276, 0
    %v278 = vsel %vm277, %v276, 0
    %v279 = vshrl.u32 %v278, 5
    %v280 = vand.u32 %v278, 31
    %v281 = vsub.s32 32, %v280
    %v282 = vshrl.u32 683565275, %v281
    %v283 = vshll.u32 683565275, %v280
    %v284 = vshrl.u32 2475754826, %v281
    %v285 = vor.u32 %v283, %v284
    %v286 = vshll.u32 2475754826, %v280
    %v287 = vshrl.u32 2131351028, %v281
    %v288 = vor.u32 %v286, %v287
    %v289 = vshll.u32 2131351028, %v280
    %v290 = vshrl.u32 2102212464, %v281
    %v291 = vor.u32 %v289, %v290
    %v292 = vshll.u32 2102212464, %v280
    %v293 = vshrl.u32 920167782, %v281
    %v294 = vor.u32 %v292, %v293
    %v295 = vshll.u32 920167782, %v280
    %v296 = vshrl.u32 1326507024, %v281
    %v297 = vor.u32 %v295, %v296
    %vm298 = vcmp.lt.s32.totalorder %v279, 1
    %vm299 = vcmp.lt.s32.totalorder %v279, 2
    %vm300 = vcmp.lt.s32.totalorder %v279, 3
    %vm301 = vcmp.lt.s32.totalorder %v279, 4
    %v302 = vsel %vm298, %v282, %v285
    %v303 = vsel %vm301, %v291, 2102212464
    %v304 = vsel %vm300, %v288, %v303
    %v305 = vsel %vm299, %v302, %v304
    %v306 = vsel %vm298, %v285, %v288
    %v307 = vsel %vm301, %v294, 920167782
    %v308 = vsel %vm300, %v291, %v307
    %v309 = vsel %vm299, %v306, %v308
    %v310 = vsel %vm298, %v288, %v291
    %v311 = vsel %vm301, %v297, 1326507024
    %v312 = vsel %vm300, %v294, %v311
    %v313 = vsel %vm299, %v310, %v312
    %v314 = vshll.u32 %v274, 8
    %v315 = vand.u32 %v314, 65535
    %v316 = vshrl.u32 %v314, 16
    %v317 = vand.u32 %v313, 65535
    %v318 = vshrl.u32 %v313, 16
    %v319 = vmul.u32 %v315, %v317
    %v320 = vmul.u32 %v315, %v318
    %v321 = vmul.u32 %v316, %v317
    %v322 = vmul.u32 %v316, %v318
    %v323 = vshll.u32 %v320, 16
    %v324 = vshrl.u32 %v320, 16
    %v325 = vshll.u32 %v321, 16
    %v326 = vshrl.u32 %v321, 16
    %vm327 = vc.u32 %v319, %v323
    %v328 = vsel %vm327, 1, 0
    %v329 = vadd.s32 %v319, %v323
    %v330 = vadd.s32 %v322, %v328
    %vm331 = vc.u32 %v329, %v325
    %v332 = vsel %vm331, 1, 0
    %v333 = vadd.s32 %v329, %v325
    %v334 = vadd.s32 %v330, %v332
    %v335 = vadd.s32 %v334, %v324
    %v336 = vadd.s32 %v335, %v326
    %v337 = vand.u32 %v314, 65535
    %v338 = vshrl.u32 %v314, 16
    %v339 = vand.u32 %v309, 65535
    %v340 = vshrl.u32 %v309, 16
    %v341 = vmul.u32 %v337, %v339
    %v342 = vmul.u32 %v337, %v340
    %v343 = vmul.u32 %v338, %v339
    %v344 = vmul.u32 %v338, %v340
    %v345 = vshll.u32 %v342, 16
    %v346 = vshrl.u32 %v342, 16
    %v347 = vshll.u32 %v343, 16
    %v348 = vshrl.u32 %v343, 16
    %vm349 = vc.u32 %v341, %v345
    %v350 = vsel %vm349, 1, 0
    %v351 = vadd.s32 %v341, %v345
    %v352 = vadd.s32 %v344, %v350
    %vm353 = vc.u32 %v351, %v347
    %v354 = vsel %vm353, 1, 0
    %v355 = vadd.s32 %v351, %v347
    %v356 = vadd.s32 %v352, %v354
    %v357 = vadd.s32 %v356, %v346
    %v358 = vadd.s32 %v357, %v348
    %v359 = vmul.u32 %v314, %v305
    %v360 = vadd.s32 %v336, %v355
    %vm361 = vc.u32 %v336, %v355
    %v362 = vadd.s32 %v358, 1
    %v363 = vsel %vm361, %v362, %v358
    %v364 = vadd.s32 %v359, %v363
    %v365 = vadd.s32 %v364, 536870912
    %v366 = vshrl.u32 %v365, 30
    %v367 = vshll.u32 %v366, 30
    %v368 = vsub.s32 %v364, %v367
    %vm369 = vcmp.lt.s32.totalorder %v368, 0
    %v370 = vsub.s32 0, %v368
    %v371 = vsel %vm369, %v370, %v368
    %v372 = vclz %v371
    %v373 = vsub.s32 %v372, 2
    %vm374 = vcmp.gt.s32.totalorder 0, %v373
    %v375 = vsel %vm374, 0, %v373
    %v376 = vsub.s32 32, %v375
    %v377 = vshll.u32 %v368, %v375
    %v378 = vshrl.u32 %v360, %v376
    %v379 = vor.u32 %v377, %v378
    %v380 = vsub.s32 4294967266, %v375
    %v381 = vadd.s32 %v380, 127
    %v382 = vshll.u32 %v381, 23
    %v383 = vor.u32 4788187, %v382
    %v384 = vand.u32 2147483647, %v383
    %v386 = vcvt.s32.f32 %v379
    %v387 = vmul.f32 %v386, %v384
    %v388 = vxor.u32 %v387, 2147483648
    %v389 = vsel %vm268, %v388, %v387
    %v390 = vsub.s32 4, %v366
    %v391 = vsel %vm268, %v390, %v366
    %v392 = vsel %vm267, %v98, %v389
    %v393 = vsel %vm267, 0, %v391
    %v394 = vmul.f32 %v392, %v392
    %v395 = vmul.f32 %v394, -0.001358992
    %v396 = vadd.f32 %v395, 0.041655596
    %v397 = vmul.f32 %v394, %v396
    %v398 = vadd.f32 %v397, -0.4999988
    %v399 = vmul.f32 %v394, %v398
    %v400 = vadd.f32 1.0, %v399
    %v401 = vmul.f32 %v392, %v392
    %v402 = vmul.f32 %v401, -0.00019511016
    %v403 = vadd.f32 %v402, 0.008332121
    %v404 = vmul.f32 %v401, %v403
    %v405 = vadd.f32 %v404, -0.16666654
    %v406 = vmul.f32 %v401, %v405
    %v407 = vadd.f32 %v406, 1.0
    %v408 = vmul.f32 %v407, %v392
    %vm409 = vweird.f32 %v98
    %v410 = vand.u32 %v393, 3
    %vm411 = vcmp.lt.s32.totalorder %v410, 2
    %vm412 = vcmp.eq.s32.totalorder %v410, 0
    %v413 = vxor.u32 %v408, 2147483648
    %v414 = vsel %vm412, %v400, %v413
    %vm415 = vcmp.eq.s32.totalorder %v410, 2
    %v416 = vxor.u32 %v400, 2147483648
    %v417 = vsel %vm415, %v416, %v408
    %v418 = vsel %vm411, %v414, %v417
    %v419 = vsel %vm409, nan, %v418
    %v420 = vand.u32 2147483647, %v99
    %vm421 = vcmp.le.f32.partialorder %v420, 0.7853982
    %vm422 = vcmp.lt.s32.totalorder %v99, 0
    %v423 = vand.u32 %v99, 2139095040
    %v424 = vshrl.u32 %v423, 23
    %v425 = vsub.s32 %v424, 127
    %v426 = vand.u32 2147483647, %v99
    %v427 = vand.u32 %v426, 8388607
    %v428 = vor.u32 %v427, 8388608
    %v429 = vsub.s32 0, %v428
    %v430 = vadd.s32 %v425, 1
    %vm431 = vcmp.gt.s32.totalorder %v430, 0
    %v432 = vsel %vm431, %v430, 0
    %v433 = vshrl.u32 %v432, 5
    %v434 = vand.u32 %v432, 31
    %v435 = vsub.s32 32, %v434
    %v436 = vshrl.u32 683565275, %v435
    %v437 = vshll.u32 683565275, %v434
    %v438 = vshrl.u32 2475754826, %v435
    %v439 = vor.u32 %v437, %v438
    %v440 = vshll.u32 2475754826, %v434
    %v441 = vshrl.u32 2131351028, %v435
    %v442 = vor.u32 %v440, %v441
    %v443 = vshll.u32 2131351028, %v434
    %v444 = vshrl.u32 2102212464, %v435
    %v445 = vor.u32 %v443, %v444
    %v446 = vshll.u32 2102212464, %v434
    %v447 = vshrl.u32 920167782, %v435
    %v448 = vor.u32 %v446, %v447
    %v449 = vshll.u32 920167782, %v434
    %v450 = vshrl.u32 1326507024, %v435
    %v451 = vor.u32 %v449, %v450
    %vm452 = vcmp.lt.s32.totalorder %v433, 1
    %vm453 = vcmp.lt.s32.totalorder %v433, 2
    %vm454 = vcmp.lt.s32.totalorder %v433, 3
    %vm455 = vcmp.lt.s32.totalorder %v433, 4
    %v456 = vsel %vm452, %v436, %v439
    %v457 = vsel %vm455, %v445, 2102212464
    %v458 = vsel %vm454, %v442, %v457
    %v459 = vsel %vm453, %v456, %v458
    %v460 = vsel %vm452, %v439, %v442
    %v461 = vsel %vm455, %v448, 920167782
    %v462 = vsel %vm454, %v445, %v461
    %v463 = vsel %vm453, %v460, %v462
    %v464 = vsel %vm452, %v442, %v445
    %v465 = vsel %vm455, %v451, 1326507024
    %v466 = vsel %vm454, %v448, %v465
    %v467 = vsel %vm453, %v464, %v466
    %v468 = vshll.u32 %v428, 8
    %v469 = vand.u32 %v468, 65535
    %v470 = vshrl.u32 %v468, 16
    %v471 = vand.u32 %v467, 65535
    %v472 = vshrl.u32 %v467, 16
    %v473 = vmul.u32 %v469, %v471
    %v474 = vmul.u32 %v469, %v472
    %v475 = vmul.u32 %v470, %v471
    %v476 = vmul.u32 %v470, %v472
    %v477 = vshll.u32 %v474, 16
    %v478 = vshrl.u32 %v474, 16
    %v479 = vshll.u32 %v475, 16
    %v480 = vshrl.u32 %v475, 16
    %vm481 = vc.u32 %v473, %v477
    %v482 = vsel %vm481, 1, 0
    %v483 = vadd.s32 %v473, %v477
    %v484 = vadd.s32 %v476, %v482
    %vm485 = vc.u32 %v483, %v479
    %v486 = vsel %vm485, 1, 0
    %v487 = vadd.s32 %v483, %v479
    %v488 = vadd.s32 %v484, %v486
    %v489 = vadd.s32 %v488, %v478
    %v490 = vadd.s32 %v489, %v480
    %v491 = vand.u32 %v468, 65535
    %v492 = vshrl.u32 %v468, 16
    %v493 = vand.u32 %v463, 65535
    %v494 = vshrl.u32 %v463, 16
    %v495 = vmul.u32 %v491, %v493
    %v496 = vmul.u32 %v491, %v494
    %v497 = vmul.u32 %v492, %v493
    %v498 = vmul.u32 %v492, %v494
    %v499 = vshll.u32 %v496, 16
    %v500 = vshrl.u32 %v496, 16
    %v501 = vshll.u32 %v497, 16
    %v502 = vshrl.u32 %v497, 16
    %vm503 = vc.u32 %v495, %v499
    %v504 = vsel %vm503, 1, 0
    %v505 = vadd.s32 %v495, %v499
    %v506 = vadd.s32 %v498, %v504
    %vm507 = vc.u32 %v505, %v501
    %v508 = vsel %vm507, 1, 0
    %v509 = vadd.s32 %v505, %v501
    %v510 = vadd.s32 %v506, %v508
    %v511 = vadd.s32 %v510, %v500
    %v512 = vadd.s32 %v511, %v502
    %v513 = vmul.u32 %v468, %v459
    %v514 = vadd.s32 %v490, %v509
    %vm515 = vc.u32 %v490, %v509
    %v516 = vadd.s32 %v512, 1
    %v517 = vsel %vm515, %v516, %v512
    %v518 = vadd.s32 %v513, %v517
    %v519 = vadd.s32 %v518, 536870912
    %v520 = vshrl.u32 %v519, 30
    %v521 = vshll.u32 %v520, 30
    %v522 = vsub.s32 %v518, %v521
    %vm523 = vcmp.lt.s32.totalorder %v522, 0
    %v524 = vsub.s32 0, %v522
    %v525 = vsel %vm523, %v524, %v522
    %v526 = vclz %v525
    %v527 = vsub.s32 %v526, 2
    %vm528 = vcmp.gt.s32.totalorder 0, %v527
    %v529 = vsel %vm528, 0, %v527
    %v530 = vsub.s32 32, %v529
    %v531 = vshll.u32 %v522, %v529
    %v532 = vshrl.u32 %v514, %v530
    %v533 = vor.u32 %v531, %v532
    %v534 = vsub.s32 4294967266, %v529
    %v535 = vadd.s32 %v534, 127
    %v536 = vshll.u32 %v535, 23
    %v537 = vor.u32 4788187, %v536
    %v538 = vand.u32 2147483647, %v537
    %v540 = vcvt.s32.f32 %v533
    %v541 = vmul.f32 %v540, %v538
    %v542 = vxor.u32 %v541, 2147483648
    %v543 = vsel %vm422, %v542, %v541
    %v544 = vsub.s32 4, %v520
    %v545 = vsel %vm422, %v544, %v520
    %v546 = vsel %vm421, %v99, %v543
    %v547 = vsel %vm421, 0, %v545
    %v548 = vmul.f32 %v546, %v546
    %v549 = vmul.f32 %v548, -0.001358992
    %v550 = vadd.f32 %v549, 0.041655596
    %v551 = vmul.f32 %v548, %v550
    %v552 = vadd.f32 %v551, -0.4999988
    %v553 = vmul.f32 %v548, %v552
    %v554 = vadd.f32 1.0, %v553
    %v555 = vmul.f32 %v546, %v546
    %v556 = vmul.f32 %v555, -0.00019511016
    %v557 = vadd.f32 %v556, 0.008332121
    %v558 = vmul.f32 %v555, %v557
    %v559 = vadd.f32 %v558, -0.16666654
    %v560 = vmul.f32 %v555, %v559
    %v561 = vadd.f32 %v560, 1.0
    %v562 = vmul.f32 %v561, %v546
    %vm563 = vweird.f32 %v99
    %v564 = vand.u32 %v547, 3
    %vm565 = vcmp.lt.s32.totalorder %v564, 2
    %vm566 = vcmp.eq.s32.totalorder %v564, 0
    %v567 = vxor.u32 %v562, 2147483648
    %v568 = vsel %vm566, %v554, %v567
    %vm569 = vcmp.eq.s32.totalorder %v564, 2
    %v570 = vxor.u32 %v554, 2147483648
    %v571 = vsel %vm569, %v570, %v562
    %v572 = vsel %vm565, %v568, %v571
    %v573 = vsel %vm563, nan, %v572
    %v574 = vand.u32 2147483647, %v100
    %vm575 = vcmp.le.f32.partialorder %v574, 0.7853982
    %vm576 = vcmp.lt.s32.totalorder %v100, 0
    %v577 = vand.u32 %v100, 2139095040
    %v578 = vshrl.u32 %v577, 23
    %v579 = vsub.s32 %v578, 127
    %v580 = vand.u32 2147483647, %v100
    %v581 = vand.u32 %v580, 8388607
    %v582 = vor.u32 %v581, 8388608
    %v583 = vsub.s32 0, %v582
    %v584 = vadd.s32 %v579, 1
    %vm585 = vcmp.gt.s32.totalorder %v584, 0
    %v586 = vsel %vm585, %v584, 0
    %v587 = vshrl.u32 %v586, 5
    %v588 = vand.u32 %v586, 31
    %v589 = vsub.s32 32, %v588
    %v590 = vshrl.u32 683565275, %v589
    %v591 = vshll.u32 683565275, %v588
    %v592 = vshrl.u32 2475754826, %v589
    %v593 = vor.u32 %v591, %v592
    %v594 = vshll.u32 2475754826, %v588
    %v595 = vshrl.u32 2131351028, %v589
    %v596 = vor.u32 %v594, %v595
    %v597 = vshll.u32 2131351028, %v588
    %v598 = vshrl.u32 2102212464, %v589
    %v599 = vor.u32 %v597, %v598
    %v600 = vshll.u32 2102212464, %v588
    %v601 = vshrl.u32 920167782, %v589
    %v602 = vor.u32 %v600, %v601
    %v603 = vshll.u32 920167782, %v588
    %v604 = vshrl.u32 1326507024, %v589
    %v605 = vor.u32 %v603, %v604
    %vm606 = vcmp.lt.s32.totalorder %v587, 1
    %vm607 = vcmp.lt.s32.totalorder %v587, 2
    %vm608 = vcmp.lt.s32.totalorder %v587, 3
    %vm609 = vcmp.lt.s32.totalorder %v587, 4
    %v610 = vsel %vm606, %v590, %v593
    %v611 = vsel %vm609, %v599, 2102212464
    %v612 = vsel %vm608, %v596, %v611
    %v613 = vsel %vm607, %v610, %v612
    %v614 = vsel %vm606, %v593, %v596
    %v615 = vsel %vm609, %v602, 920167782
    %v616 = vsel %vm608, %v599, %v615
    %v617 = vsel %vm607, %v614, %v616
    %v618 = vsel %vm606, %v596, %v599
    %v619 = vsel %vm609, %v605, 1326507024
    %v620 = vsel %vm608, %v602, %v619
    %v621 = vsel %vm607, %v618, %v620
    %v622 = vshll.u32 %v582, 8
    %v623 = vand.u32 %v622, 65535
    %v624 = vshrl.u32 %v622, 16
    %v625 = vand.u32 %v621, 65535
    %v626 = vshrl.u32 %v621, 16
    %v627 = vmul.u32 %v623, %v625
    %v628 = vmul.u32 %v623, %v626
    %v629 = vmul.u32 %v624, %v625
    %v630 = vmul.u32 %v624, %v626
    %v631 = vshll.u32 %v628, 16
    %v632 = vshrl.u32 %v628, 16
    %v633 = vshll.u32 %v629, 16
    %v634 = vshrl.u32 %v629, 16
    %vm635 = vc.u32 %v627, %v631
    %v636 = vsel %vm635, 1, 0
    %v637 = vadd.s32 %v627, %v631
    %v638 = vadd.s32 %v630, %v636
    %vm639 = vc.u32 %v637, %v633
    %v640 = vsel %vm639, 1, 0
    %v641 = vadd.s32 %v637, %v633
    %v642 = vadd.s32 %v638, %v640
    %v643 = vadd.s32 %v642, %v632
    %v644 = vadd.s32 %v643, %v634
    %v645 = vand.u32 %v622, 65535
    %v646 = vshrl.u32 %v622, 16
    %v647 = vand.u32 %v617, 65535
    %v648 = vshrl.u32 %v617, 16
    %v649 = vmul.u32 %v645, %v647
    %v650 = vmul.u32 %v645, %v648
    %v651 = vmul.u32 %v646, %v647
    %v652 = vmul.u32 %v646, %v648
    %v653 = vshll.u32 %v650, 16
    %v654 = vshrl.u32 %v650, 16
    %v655 = vshll.u32 %v651, 16
    %v656 = vshrl.u32 %v651, 16
    %vm657 = vc.u32 %v649, %v653
    %v658 = vsel %vm657, 1, 0
    %v659 = vadd.s32 %v649, %v653
    %v660 = vadd.s32 %v652, %v658
    %vm661 = vc.u32 %v659, %v655
    %v662 = vsel %vm661, 1, 0
    %v663 = vadd.s32 %v659, %v655
    %v664 = vadd.s32 %v660, %v662
    %v665 = vadd.s32 %v664, %v654
    %v666 = vadd.s32 %v665, %v656
    %v667 = vmul.u32 %v622, %v613
    %v668 = vadd.s32 %v644, %v663
    %vm669 = vc.u32 %v644, %v663
    %v670 = vadd.s32 %v666, 1
    %v671 = vsel %vm669, %v670, %v666
    %v672 = vadd.s32 %v667, %v671
    %v673 = vadd.s32 %v672, 536870912
    %v674 = vshrl.u32 %v673, 30
    %v675 = vshll.u32 %v674, 30
    %v676 = vsub.s32 %v672, %v675
    %vm677 = vcmp.lt.s32.totalorder %v676, 0
    %v678 = vsub.s32 0, %v676
    %v679 = vsel %vm677, %v678, %v676
    %v680 = vclz %v679
    %v681 = vsub.s32 %v680, 2
    %vm682 = vcmp.gt.s32.totalorder 0, %v681
    %v683 = vsel %vm682, 0, %v681
    %v684 = vsub.s32 32, %v683
    %v685 = vshll.u32 %v676, %v683
    %v686 = vshrl.u32 %v668, %v684
    %v687 = vor.u32 %v685, %v686
    %v688 = vsub.s32 4294967266, %v683
    %v689 = vadd.s32 %v688, 127
    %v690 = vshll.u32 %v689, 23
    %v691 = vor.u32 4788187, %v690
    %v692 = vand.u32 2147483647, %v691
    %v694 = vcvt.s32.f32 %v687
    %v695 = vmul.f32 %v694, %v692
    %v696 = vxor.u32 %v695, 2147483648
    %v697 = vsel %vm576, %v696, %v695
    %v698 = vsub.s32 4, %v674
    %v699 = vsel %vm576, %v698, %v674
    %v700 = vsel %vm575, %v100, %v697
    %v701 = vsel %vm575, 0, %v699
    %v702 = vmul.f32 %v700, %v700
    %v703 = vmul.f32 %v702, -0.001358992
    %v704 = vadd.f32 %v703, 0.041655596
    %v705 = vmul.f32 %v702, %v704
    %v706 = vadd.f32 %v705, -0.4999988
    %v707 = vmul.f32 %v702, %v706
    %v708 = vadd.f32 1.0, %v707
    %v709 = vmul.f32 %v700, %v700
    %v710 = vmul.f32 %v709, -0.00019511016
    %v711 = vadd.f32 %v710, 0.008332121
    %v712 = vmul.f32 %v709, %v711
    %v713 = vadd.f32 %v712, -0.16666654
    %v714 = vmul.f32 %v709, %v713
    %v715 = vadd.f32 %v714, 1.0
    %v716 = vmul.f32 %v715, %v700
    %vm717 = vweird.f32 %v100
    %v718 = vand.u32 %v701, 3
    %vm719 = vcmp.lt.s32.totalorder %v718, 2
    %vm720 = vcmp.eq.s32.totalorder %v718, 0
    %v721 = vxor.u32 %v716, 2147483648
    %v722 = vsel %vm720, %v708, %v721
    %vm723 = vcmp.eq.s32.totalorder %v718, 2
    %v724 = vxor.u32 %v708, 2147483648
    %v725 = vsel %vm723, %v724, %v716
    %v726 = vsel %vm719, %v722, %v725
    %v727 = vsel %vm717, nan, %v726
    %v728 = vand.u32 2147483647, %v101
    %vm729 = vcmp.le.f32.partialorder %v728, 0.7853982
    %vm730 = vcmp.lt.s32.totalorder %v101, 0
    %v731 = vand.u32 %v101, 2139095040
    %v732 = vshrl.u32 %v731, 23
    %v733 = vsub.s32 %v732, 127
    %v734 = vand.u32 2147483647, %v101
    %v735 = vand.u32 %v734, 8388607
    %v736 = vor.u32 %v735, 8388608
    %v737 = vsub.s32 0, %v736
    %v738 = vadd.s32 %v733, 1
    %vm739 = vcmp.gt.s32.totalorder %v738, 0
    %v740 = vsel %vm739, %v738, 0
    %v741 = vshrl.u32 %v740, 5
    %v742 = vand.u32 %v740, 31
    %v743 = vsub.s32 32, %v742
    %v744 = vshrl.u32 683565275, %v743
    %v745 = vshll.u32 683565275, %v742
    %v746 = vshrl.u32 2475754826, %v743
    %v747 = vor.u32 %v745, %v746
    %v748 = vshll.u32 2475754826, %v742
    %v749 = vshrl.u32 2131351028, %v743
    %v750 = vor.u32 %v748, %v749
    %v751 = vshll.u32 2131351028, %v742
    %v752 = vshrl.u32 2102212464, %v743
    %v753 = vor.u32 %v751, %v752
    %v754 = vshll.u32 2102212464, %v742
    %v755 = vshrl.u32 920167782, %v743
    %v756 = vor.u32 %v754, %v755
    %v757 = vshll.u32 920167782, %v742
    %v758 = vshrl.u32 1326507024, %v743
    %v759 = vor.u32 %v757, %v758
    %vm760 = vcmp.lt.s32.totalorder %v741, 1
    %vm761 = vcmp.lt.s32.totalorder %v741, 2
    %vm762 = vcmp.lt.s32.totalorder %v741, 3
    %vm763 = vcmp.lt.s32.totalorder %v741, 4
    %v764 = vsel %vm760, %v744, %v747
    %v765 = vsel %vm763, %v753, 2102212464
    %v766 = vsel %vm762, %v750, %v765
    %v767 = vsel %vm761, %v764, %v766
    %v768 = vsel %vm760, %v747, %v750
    %v769 = vsel %vm763, %v756, 920167782
    %v770 = vsel %vm762, %v753, %v769
    %v771 = vsel %vm761, %v768, %v770
    %v772 = vsel %vm760, %v750, %v753
    %v773 = vsel %vm763, %v759, 1326507024
    %v774 = vsel %vm762, %v756, %v773
    %v775 = vsel %vm761, %v772, %v774
    %v776 = vshll.u32 %v736, 8
    %v777 = vand.u32 %v776, 65535
    %v778 = vshrl.u32 %v776, 16
    %v779 = vand.u32 %v775, 65535
    %v780 = vshrl.u32 %v775, 16
    %v781 = vmul.u32 %v777, %v779
    %v782 = vmul.u32 %v777, %v780
    %v783 = vmul.u32 %v778, %v779
    %v784 = vmul.u32 %v778, %v780
    %v785 = vshll.u32 %v782, 16
    %v786 = vshrl.u32 %v782, 16
    %v787 = vshll.u32 %v783, 16
    %v788 = vshrl.u32 %v783, 16
    %vm789 = vc.u32 %v781, %v785
    %v790 = vsel %vm789, 1, 0
    %v791 = vadd.s32 %v781, %v785
    %v792 = vadd.s32 %v784, %v790
    %vm793 = vc.u32 %v791, %v787
    %v794 = vsel %vm793, 1, 0
    %v795 = vadd.s32 %v791, %v787
    %v796 = vadd.s32 %v792, %v794
    %v797 = vadd.s32 %v796, %v786
    %v798 = vadd.s32 %v797, %v788
    %v799 = vand.u32 %v776, 65535
    %v800 = vshrl.u32 %v776, 16
    %v801 = vand.u32 %v771, 65535
    %v802 = vshrl.u32 %v771, 16
    %v803 = vmul.u32 %v799, %v801
    %v804 = vmul.u32 %v799, %v802
    %v805 = vmul.u32 %v800, %v801
    %v806 = vmul.u32 %v800, %v802
    %v807 = vshll.u32 %v804, 16
    %v808 = vshrl.u32 %v804, 16
    %v809 = vshll.u32 %v805, 16
    %v810 = vshrl.u32 %v805, 16
    %vm811 = vc.u32 %v803, %v807
    %v812 = vsel %vm811, 1, 0
    %v813 = vadd.s32 %v803, %v807
    %v814 = vadd.s32 %v806, %v812
    %vm815 = vc.u32 %v813, %v809
    %v816 = vsel %vm815, 1, 0
    %v817 = vadd.s32 %v813, %v809
    %v818 = vadd.s32 %v814, %v816
    %v819 = vadd.s32 %v818, %v808
    %v820 = vadd.s32 %v819, %v810
    %v821 = vmul.u32 %v776, %v767
    %v822 = vadd.s32 %v798, %v817
    %vm823 = vc.u32 %v798, %v817
    %v824 = vadd.s32 %v820, 1
    %v825 = vsel %vm823, %v824, %v820
    %v826 = vadd.s32 %v821, %v825
    %v827 = vadd.s32 %v826, 536870912
    %v828 = vshrl.u32 %v827, 30
    %v829 = vshll.u32 %v828, 30
    %v830 = vsub.s32 %v826, %v829
    %vm831 = vcmp.lt.s32.totalorder %v830, 0
    %v832 = vsub.s32 0, %v830
    %v833 = vsel %vm831, %v832, %v830
    %v834 = vclz %v833
    %v835 = vsub.s32 %v834, 2
    %vm836 = vcmp.gt.s32.totalorder 0, %v835
    %v837 = vsel %vm836, 0, %v835
    %v838 = vsub.s32 32, %v837
    %v839 = vshll.u32 %v830, %v837
    %v840 = vshrl.u32 %v822, %v838
    %v841 = vor.u32 %v839, %v840
    %v842 = vsub.s32 4294967266, %v837
    %v843 = vadd.s32 %v842, 127
    %v844 = vshll.u32 %v843, 23
    %v845 = vor.u32 4788187, %v844
    %v846 = vand.u32 2147483647, %v845
    %v848 = vcvt.s32.f32 %v841
    %v849 = vmul.f32 %v848, %v846
    %v850 = vxor.u32 %v849, 2147483648
    %v851 = vsel %vm730, %v850, %v849
    %v852 = vsub.s32 4, %v828
    %v853 = vsel %vm730, %v852, %v828
    %v854 = vsel %vm729, %v101, %v851
    %v855 = vsel %vm729, 0, %v853
    %v856 = vmul.f32 %v854, %v854
    %v857 = vmul.f32 %v856, -0.001358992
    %v858 = vadd.f32 %v857, 0.041655596
    %v859 = vmul.f32 %v856, %v858
    %v860 = vadd.f32 %v859, -0.4999988
    %v861 = vmul.f32 %v856, %v860
    %v862 = vadd.f32 1.0, %v861
    %v863 = vmul.f32 %v854, %v854
    %v864 = vmul.f32 %v863, -0.00019511016
    %v865 = vadd.f32 %v864, 0.008332121
    %v866 = vmul.f32 %v863, %v865
    %v867 = vadd.f32 %v866, -0.16666654
    %v868 = vmul.f32 %v863, %v867
    %v869 = vadd.f32 %v868, 1.0
    %v870 = vmul.f32 %v869, %v854
    %vm871 = vweird.f32 %v101
    %v872 = vand.u32 %v855, 3
    %vm873 = vcmp.lt.s32.totalorder %v872, 2
    %vm874 = vcmp.eq.s32.totalorder %v872, 0
    %v875 = vxor.u32 %v870, 2147483648
    %v876 = vsel %vm874, %v862, %v875
    %vm877 = vcmp.eq.s32.totalorder %v872, 2
    %v878 = vxor.u32 %v862, 2147483648
    %v879 = vsel %vm877, %v878, %v870
    %v880 = vsel %vm873, %v876, %v879
    %v881 = vsel %vm871, nan, %v880
    %v882 = vmul.f32 %v103, %v265
    %v883 = vmul.f32 %v105, %v419
    %v884 = vmul.f32 %v107, %v573
    %v885 = vmul.f32 %v109, %v727
    %v886 = vmul.f32 %v111, %v881
    %887 = vset.pattern.permute.xlu0 3
    %888 = vperm.xlu0 %887, %v13
    %v889 = vpop.permute.xlu0 %888
    %891 = vset.pattern.permute.xlu0 3
    %892 = vperm.xlu0 %891, %v14
    %v893 = vpop.permute.xlu0 %892
    %895 = vset.pattern.permute.xlu0 3
    %896 = vperm.xlu0 %895, %v15
    %v897 = vpop.permute.xlu0 %896
    %899 = vset.pattern.permute.xlu0 3
    %900 = vperm.xlu0 %899, %v16
    %v901 = vpop.permute.xlu0 %900
    %903 = vset.pattern.permute.xlu0 3
    %904 = vperm.xlu0 %903, %v17
    %v905 = vpop.permute.xlu0 %904
    %v907 = vmul.f32 %v889, %v882
    %v908 = vmul.f32 %v893, %v883
    %v909 = vmul.f32 %v897, %v884
    %v910 = vmul.f32 %v901, %v885
    %v911 = vmul.f32 %v905, %v886
    %vm912 = vcmask 64512
    %v913 = vsel %vm912, %v907, 0.0
    %v914 = vsel %vm912, %v908, 0.0
    %v915 = vadd.f32 %v913, %v914
    %v916 = vsel %vm912, %v909, 0.0
    %v917 = vadd.f32 %v915, %v916
    %v918 = vsel %vm912, %v910, 0.0
    %v919 = vadd.f32 %v917, %v918
    %v920 = vsel %vm912, %v911, 0.0
    %v921 = vadd.f32 %v919, %v920
    %v922 = vrot.slane %v921, 4
    %v923 = vadd.f32 %v921, %v922
    %v924 = vrot.slane %v923, 2
    %v925 = vadd.f32 %v923, %v924
    %v926 = vrot.slane %v925, 1
    %v927 = vadd.f32 %v925, %v926
    %929 = vset.pattern.permute.xlu0 4
    %930 = vperm.xlu0 %929, %v18
    %v931 = vpop.permute.xlu0 %930
    %v933 = vadd.f32 %v927, %v931
    %vm934 = vcmask 57344
    %935 = vst.msk [vmem:[#allocation2] sm:$0x1] %vm934, %v933
    // Predicated region
    $region10: #{tpu_custom_call.1} parent=1 // pred_check
      _
    $region11: #{tpu_custom_call.1} parent=1 // pred_check_branch
      %937 = sbr.rel (0) target = $region13
    $region12: #{tpu_custom_call.1} parent=1 // pred_region
      %939 = vsyncadd [#allocation3], 0
      %s941 = sshll.u32 [#allocation2], 4
      %s942 = int_to_ptr.vmem [resolvable:$true] %s941
      %s943 = sshll.u32 %s2, 4
      %s944 = int_to_ptr.hbm [resolvable:$true] %s943
      %946 = dma.vmem_to_hbm [thread:$0]  %s942, 16, %s944, [#allocation3]
    $region13: #{tpu_custom_call.1} parent=1 // pred_fallthru
      _
    // Predicated region
    $region14: #{tpu_custom_call.1} parent=1 // pred_check
      _
    $region15: #{tpu_custom_call.1} parent=1 // pred_check_branch
      %948 = sbr.rel (0) target = $region17
    $region16: #{tpu_custom_call.1} parent=1 // pred_region
      %950 = dma.done [#allocation3], 16
    $region17: #{tpu_custom_call.1} parent=1 // pred_fallthru
      _
    %951 = vsyncpa [#allocation3], 1

</llo_original>
